<compile_context>
chip_gen: v5e
topology: v5e:2x2
jax: 0.10.0
libtpu: 0.0.40
codegen_flags: <defaults>
</compile_context>

<pallas_src>
import numpy as np
import jax
import jax.numpy as jnp
from jax import lax
from jax.experimental import pallas as pl
from jax.experimental.pallas import tpu as pltpu


# ---------------------------------------------------------------------------
# Fused CBAM kernel.
#   x_ref   : (bb, C, S)   input block (S = H*W on lanes, C on sublanes)
#   w1t_ref : (C, hid)     fc1 weight, pre-transposed (C sublane-resident)
#   w2_ref  : (C, hid)     fc2 weight
#   m_ref   : (2*S, S)     conv-as-matmul matrix for the KxK spatial conv
#   out_ref : (bb, C, S)
# ---------------------------------------------------------------------------
def _cbam_kernel(x_ref, w1t_ref, w2_ref, m_ref, out_ref):
    x = x_ref[...]                                   # (bb, C, S)
    w1t = w1t_ref[...]                               # (C, hid)
    w2m = w2_ref[...]                                # (C, hid)
    hid = w1t.shape[1]

    # ----- channel attention -------------------------------------------------
    # Global avg/max pool over S with keepdims: results stay (bb, C, 1) with C
    # on the sublane axis, so the final broadcast-multiply with x needs no
    # lane<->sublane relayout.
    avg_v = jnp.mean(x, axis=2, keepdims=True)       # (bb, C, 1)
    max_v = jnp.max(x, axis=2, keepdims=True)        # (bb, C, 1)

    # Tiny shared MLP (hid = C // ratio, typically 1-2), done on the VPU/XLU as
    # statically-unrolled rank-1 passes instead of two sub-MXU-granularity
    # jnp.dot round trips.  fc2 is linear, so
    #   fc2(relu(fc1(avg))) + fc2(relu(fc1(max)))
    #     = sum_j (relu(h_avg_j) + relu(h_max_j)) * w2[:, j].
    o = None
    for j in range(hid):                             # static unroll
        w1j = w1t[:, j:j + 1][None, :, :]            # (1, C, 1)
        w2j = w2m[:, j:j + 1][None, :, :]            # (1, C, 1)
        ha = jnp.maximum(jnp.sum(avg_v * w1j, axis=1, keepdims=True), 0.0)  # (bb,1,1)
        hm = jnp.maximum(jnp.sum(max_v * w1j, axis=1, keepdims=True), 0.0)  # (bb,1,1)
        term = (ha + hm) * w2j                       # (bb, C, 1)
        o = term if o is None else o + term
    ca = jax.nn.sigmoid(o)                           # (bb, C, 1)

    xca = x * ca                                     # (bb, C, S) channel-reweighted

    # ----- spatial attention --------------------------------------------------
    # Channel mean/max maps are lane-dense (S on lanes); the KxK "same" conv is
    # one MXU matmul against the precomputed conv matrix.
    mean_map = jnp.mean(xca, axis=1)                 # (bb, S)
    max_map = jnp.max(xca, axis=1)                   # (bb, S)
    maps = jnp.concatenate([mean_map, max_map], axis=1)          # (bb, 2S)
    conv_mat = m_ref[...]                            # (2S, S), f32 or bf16
    conv = jnp.dot(maps.astype(conv_mat.dtype), conv_mat,
                   preferred_element_type=jnp.float32)           # (bb, S)
    sa = jax.nn.sigmoid(conv)                        # (bb, S)

    out_ref[...] = (xca * sa[:, None, :]).astype(out_ref.dtype)  # lane-dense store


# ---------------------------------------------------------------------------
# Build the (2*S, S) matrix M such that, for flattened maps m of shape (2*S,),
#   (m @ M)[i*W + j] == Conv2d(2->1, KxK, pad=K//2, bias=False)(maps)[i, j]
# When the conv weights are concrete (the common case) the matrix is built on
# the host with numpy -- no per-call device scatter.  Callers that update the
# weights rarely should hoist/memoize this outside the per-step path.
# ---------------------------------------------------------------------------
def _conv_matrix_indices(K, H, W):
    pad = K // 2
    c, di, dj, i, j = np.meshgrid(
        np.arange(2), np.arange(K), np.arange(K), np.arange(H), np.arange(W),
        indexing="ij")
    ii = i + di - pad
    jj = j + dj - pad
    valid = (ii >= 0) & (ii < H) & (jj >= 0) & (jj < W)
    c, di, dj, i, j, ii, jj = (a[valid] for a in (c, di, dj, i, j, ii, jj))
    rows = c * (H * W) + ii * W + jj     # input index  (which map element)
    cols = i * W + j                     # output index (which conv output)
    return rows, cols, c, di, dj


def build_conv_matrix(w_sa, H, W, dtype=jnp.float32):
    K = w_sa.shape[-1]
    S = H * W
    rows, cols, c, di, dj = _conv_matrix_indices(K, H, W)
    try:
        w_np = np.asarray(jax.device_get(w_sa))     # concrete weights -> host build
    except Exception:                               # traced weights (inside jit)
        w_np = None
    if w_np is not None:
        m = np.zeros((2 * S, S), np.float32)
        m[rows, cols] = w_np[0, c, di, dj]          # unique (row, col) pairs
        return jnp.asarray(m, dtype=dtype)
    # jit-friendly fallback; indices are unique so .set is exact.
    m = jnp.zeros((2 * S, S), jnp.float32).at[rows, cols].set(w_sa[0, c, di, dj])
    return m.astype(dtype)


# ---------------------------------------------------------------------------
# Wrapper
# ---------------------------------------------------------------------------
def cbam_pallas(x, w1, w2, w_sa, *, batch_block=None, mxu_dtype=jnp.float32):
    B, C, H, W = x.shape
    S = H * W
    hid = w1.shape[0]

    # Default: the whole batch in one grid step (grid=(1,)).  For large B pick
    # batch_block to fill the MXU M dimension (>=128 v5e, >=256 v6e/v7x) while
    # respecting VMEM (bb*~128 KiB for x+out double-buffered; v7x has 64 MiB),
    # and keep grid >= 2 on v7x so both TensorCores get full blocks.
    bb = B if batch_block is None else batch_block
    assert B % bb == 0, "batch_block must divide B"
    grid = (B // bb,)

    x_flat = x.reshape(B, C, S)                     # contiguous reshape (free)
    w1t = jnp.asarray(w1).T                         # (C, hid) -- C sublane-resident
    w2m = jnp.asarray(w2)                           # (C, hid)
    conv_mat = build_conv_matrix(w_sa, H, W, dtype=mxu_dtype)  # (2S, S)

    out_flat = pl.pallas_call(
        _cbam_kernel,
        grid=grid,
        in_specs=[
            pl.BlockSpec((bb, C, S), lambda b: (b, 0, 0)),
            pl.BlockSpec((C, hid), lambda b: (0, 0)),
            pl.BlockSpec((C, hid), lambda b: (0, 0)),
            pl.BlockSpec((2 * S, S), lambda b: (0, 0)),
        ],
        out_specs=pl.BlockSpec((bb, C, S), lambda b: (b, 0, 0)),
        out_shape=jax.ShapeDtypeStruct((B, C, S), x.dtype),
        input_output_aliases={0: 0},                # out reuses x's HBM footprint
        compiler_params=pltpu.CompilerParams(dimension_semantics=("parallel",)),
    )(x_flat, w1t, w2m, conv_mat)

    return out_flat.reshape(B, C, H, W)


# ---------------------------------------------------------------------------
# Pure-JAX reference (mirrors the PyTorch forward exactly)
# ---------------------------------------------------------------------------
def cbam_reference(x, w1, w2, w_sa):
    avg = jnp.mean(x, axis=(2, 3), keepdims=True)
    mx = jnp.max(x, axis=(2, 3), keepdims=True)

    def mlp(v):
        h = jnp.einsum('bcij,oc->boij', v, w1)
        h = jnp.maximum(h, 0.0)
        return jnp.einsum('bhij,oh->boij', h, w2)

    ca = jax.nn.sigmoid(mlp(avg) + mlp(mx))
    xca = x * ca

    m = jnp.concatenate(
        [jnp.mean(xca, axis=1, keepdims=True),
         jnp.max(xca, axis=1, keepdims=True)], axis=1)
    p = w_sa.shape[-1] // 2
    conv = lax.conv_general_dilated(
        m, w_sa, window_strides=(1, 1), padding=((p, p), (p, p)),
        dimension_numbers=('NCHW', 'OIHW', 'NCHW'))
    return xca * jax.nn.sigmoid(conv)


if __name__ == "__main__":
    B, C, H, W = 2, 32, 16, 16     # in_planes=32, ratio=16 -> hidden=2
    ratio, ksize = 16, 7
    hid = C // ratio

    key = jax.random.PRNGKey(0)
    kx, k1, k2, k3 = jax.random.split(key, 4)
    x = jax.random.normal(kx, (B, C, H, W), jnp.float32)
    w1 = jax.random.normal(k1, (hid, C), jnp.float32) * 0.2      # fc1 weight (1x1 conv)
    w2 = jax.random.normal(k2, (C, hid), jnp.float32) * 0.2      # fc2 weight (1x1 conv)
    w_sa = jax.random.normal(k3, (1, 2, ksize, ksize), jnp.float32) * 0.1  # 7x7 conv

    ref = cbam_reference(x, w1, w2, w_sa)

    # f32 path (bit-faithful to the module).
    out = jax.block_until_ready(cbam_pallas(x, w1, w2, w_sa))
    np.testing.assert_allclose(np.asarray(out), np.asarray(ref), rtol=1e-4, atol=1e-4)

    # bf16 MXU-operand path for the spatial conv (v6e/v7x fast path, f32 accumulate).
    out_bf16 = jax.block_until_ready(
        cbam_pallas(x, w1, w2, w_sa, mxu_dtype=jnp.bfloat16))
    np.testing.assert_allclose(np.asarray(out_bf16), np.asarray(ref),
                               rtol=5e-2, atol=5e-2)

    print("KERNEL_OK")
</pallas_src>

<mosaic_0001>
module attributes {stable_mosaic.version = 11 : i64} {
  func.func @_cbam_kernel(%arg0: i32, %arg1: memref<2x32x256xf32, #tpu.memory_space<vmem>>, %arg2: memref<32x2xf32, #tpu.memory_space<vmem>>, %arg3: memref<32x2xf32, #tpu.memory_space<vmem>>, %arg4: memref<512x256xf32, #tpu.memory_space<vmem>>, %arg5: memref<2x32x256xf32, #tpu.memory_space<vmem>>) attributes {dimension_semantics = [#tpu.dimension_semantics<parallel>], iteration_bounds = array<i64: 1>, scalar_prefetch = 0 : i64, scratch_operands = 0 : i64, tpu.core_type = #tpu.core_type<tc>, window_params = [{transform_indices = @transform_0, window_bounds = array<i64: 2, 32, 256>}, {pipeline_mode = #tpu.pipeline_mode<synchronous>, transform_indices = @transform_1, window_bounds = array<i64: 32, 2>}, {pipeline_mode = #tpu.pipeline_mode<synchronous>, transform_indices = @transform_2, window_bounds = array<i64: 32, 2>}, {pipeline_mode = #tpu.pipeline_mode<synchronous>, transform_indices = @transform_3, window_bounds = array<i64: 512, 256>}, {transform_indices = @transform_4, window_bounds = array<i64: 2, 32, 256>}]} {
    %c0 = arith.constant 0 : index
    %c0_0 = arith.constant 0 : index
    %c0_1 = arith.constant 0 : index
    %0 = vector.load %arg1[%c0, %c0_0, %c0_1] : memref<2x32x256xf32, #tpu.memory_space<vmem>>, vector<2x32x256xf32>
    %c0_2 = arith.constant 0 : index
    %c0_3 = arith.constant 0 : index
    %1 = vector.load %arg2[%c0_2, %c0_3] : memref<32x2xf32, #tpu.memory_space<vmem>>, vector<32x2xf32>
    %c0_4 = arith.constant 0 : index
    %c0_5 = arith.constant 0 : index
    %2 = vector.load %arg3[%c0_4, %c0_5] : memref<32x2xf32, #tpu.memory_space<vmem>>, vector<32x2xf32>
    %cst = arith.constant dense<0.000000e+00> : vector<2x32xf32>
    %3 = vector.multi_reduction <add>, %0, %cst [2] : vector<2x32x256xf32> to vector<2x32xf32>
    %4 = vector.shape_cast %3 : vector<2x32xf32> to vector<2x32x1xf32>
    %cst_6 = arith.constant 2.560000e+02 : f32
    %5 = vector.broadcast %cst_6 : f32 to vector<2x32x1xf32>
    %6 = arith.divf %4, %5 : vector<2x32x1xf32>
    %cst_7 = arith.constant dense<0xFF800000> : vector<2x32xf32>
    %7 = vector.multi_reduction <maximumf>, %0, %cst_7 [2] : vector<2x32x256xf32> to vector<2x32xf32>
    %8 = vector.shape_cast %7 : vector<2x32xf32> to vector<2x32x1xf32>
    %9 = vector.extract_strided_slice %1 {offsets = [0, 0], sizes = [32, 1], strides = [1, 1]} : vector<32x2xf32> to vector<32x1xf32>
    %10 = vector.shape_cast %9 : vector<32x1xf32> to vector<1x32x1xf32>
    %11 = vector.extract_strided_slice %2 {offsets = [0, 0], sizes = [32, 1], strides = [1, 1]} : vector<32x2xf32> to vector<32x1xf32>
    %12 = vector.shape_cast %11 : vector<32x1xf32> to vector<1x32x1xf32>
    %13 = vector.broadcast %10 : vector<1x32x1xf32> to vector<2x32x1xf32>
    %14 = arith.mulf %6, %13 : vector<2x32x1xf32>
    %cst_8 = arith.constant dense<0.000000e+00> : vector<2x1xf32>
    %15 = vector.multi_reduction <add>, %14, %cst_8 [1] : vector<2x32x1xf32> to vector<2x1xf32>
    %16 = vector.shape_cast %15 : vector<2x1xf32> to vector<2x1x1xf32>
    %cst_9 = arith.constant 0.000000e+00 : f32
    %17 = vector.broadcast %cst_9 : f32 to vector<2x1x1xf32>
    %18 = arith.maximumf %16, %17 : vector<2x1x1xf32>
    %19 = vector.broadcast %10 : vector<1x32x1xf32> to vector<2x32x1xf32>
    %20 = arith.mulf %8, %19 : vector<2x32x1xf32>
    %cst_10 = arith.constant dense<0.000000e+00> : vector<2x1xf32>
    %21 = vector.multi_reduction <add>, %20, %cst_10 [1] : vector<2x32x1xf32> to vector<2x1xf32>
    %22 = vector.shape_cast %21 : vector<2x1xf32> to vector<2x1x1xf32>
    %cst_11 = arith.constant 0.000000e+00 : f32
    %23 = vector.broadcast %cst_11 : f32 to vector<2x1x1xf32>
    %24 = arith.maximumf %22, %23 : vector<2x1x1xf32>
    %25 = arith.addf %18, %24 : vector<2x1x1xf32>
    %26 = vector.broadcast %25 : vector<2x1x1xf32> to vector<2x32x1xf32>
    %27 = vector.broadcast %12 : vector<1x32x1xf32> to vector<2x32x1xf32>
    %28 = arith.mulf %26, %27 : vector<2x32x1xf32>
    %29 = vector.extract_strided_slice %1 {offsets = [0, 1], sizes = [32, 1], strides = [1, 1]} : vector<32x2xf32> to vector<32x1xf32>
    %30 = vector.shape_cast %29 : vector<32x1xf32> to vector<1x32x1xf32>
    %31 = vector.extract_strided_slice %2 {offsets = [0, 1], sizes = [32, 1], strides = [1, 1]} : vector<32x2xf32> to vector<32x1xf32>
    %32 = vector.shape_cast %31 : vector<32x1xf32> to vector<1x32x1xf32>
    %33 = vector.broadcast %30 : vector<1x32x1xf32> to vector<2x32x1xf32>
    %34 = arith.mulf %6, %33 : vector<2x32x1xf32>
    %cst_12 = arith.constant dense<0.000000e+00> : vector<2x1xf32>
    %35 = vector.multi_reduction <add>, %34, %cst_12 [1] : vector<2x32x1xf32> to vector<2x1xf32>
    %36 = vector.shape_cast %35 : vector<2x1xf32> to vector<2x1x1xf32>
    %cst_13 = arith.constant 0.000000e+00 : f32
    %37 = vector.broadcast %cst_13 : f32 to vector<2x1x1xf32>
    %38 = arith.maximumf %36, %37 : vector<2x1x1xf32>
    %39 = vector.broadcast %30 : vector<1x32x1xf32> to vector<2x32x1xf32>
    %40 = arith.mulf %8, %39 : vector<2x32x1xf32>
    %cst_14 = arith.constant dense<0.000000e+00> : vector<2x1xf32>
    %41 = vector.multi_reduction <add>, %40, %cst_14 [1] : vector<2x32x1xf32> to vector<2x1xf32>
    %42 = vector.shape_cast %41 : vector<2x1xf32> to vector<2x1x1xf32>
    %cst_15 = arith.constant 0.000000e+00 : f32
    %43 = vector.broadcast %cst_15 : f32 to vector<2x1x1xf32>
    %44 = arith.maximumf %42, %43 : vector<2x1x1xf32>
    %45 = arith.addf %38, %44 : vector<2x1x1xf32>
    %46 = vector.broadcast %45 : vector<2x1x1xf32> to vector<2x32x1xf32>
    %47 = vector.broadcast %32 : vector<1x32x1xf32> to vector<2x32x1xf32>
    %48 = arith.mulf %46, %47 : vector<2x32x1xf32>
    %49 = arith.addf %28, %48 : vector<2x32x1xf32>
    %50 = arith.negf %49 : vector<2x32x1xf32>
    %51 = math.exp %50 : vector<2x32x1xf32>
    %cst_16 = arith.constant 1.000000e+00 : f32
    %52 = vector.broadcast %cst_16 : f32 to vector<2x32x1xf32>
    %53 = arith.addf %52, %51 : vector<2x32x1xf32>
    %54 = arith.divf %52, %53 : vector<2x32x1xf32>
    %55 = vector.broadcast %54 : vector<2x32x1xf32> to vector<2x32x256xf32>
    %56 = arith.mulf %0, %55 : vector<2x32x256xf32>
    %cst_17 = arith.constant dense<0.000000e+00> : vector<2x256xf32>
    %57 = vector.multi_reduction <add>, %56, %cst_17 [1] : vector<2x32x256xf32> to vector<2x256xf32>
    %cst_18 = arith.constant 3.200000e+01 : f32
    %58 = vector.broadcast %cst_18 : f32 to vector<2x256xf32>
    %59 = arith.divf %57, %58 : vector<2x256xf32>
    %cst_19 = arith.constant dense<0xFF800000> : vector<2x256xf32>
    %60 = vector.multi_reduction <maximumf>, %56, %cst_19 [1] : vector<2x32x256xf32> to vector<2x256xf32>
    %61 = tpu.concatenate %59, %60 in 1 : vector<2x256xf32>, vector<2x256xf32> -> vector<2x512xf32>
    %c0_20 = arith.constant 0 : index
    %c0_21 = arith.constant 0 : index
    %62 = vector.load %arg4[%c0_20, %c0_21] : memref<512x256xf32, #tpu.memory_space<vmem>>, vector<512x256xf32>
    %cst_22 = arith.constant dense<0.000000e+00> : vector<2x256xf32>
    %63 = tpu.matmul %61, %62, %cst_22 {dimension_numbers = #tpu.dot_dimension_numbers<[1], [0], [0], [1], [0, 0, 1, 1], [], []>} : vector<2x512xf32>, vector<512x256xf32>, vector<2x256xf32> -> vector<2x256xf32>
    %64 = arith.negf %63 : vector<2x256xf32>
    %65 = math.exp %64 : vector<2x256xf32>
    %cst_23 = arith.constant 1.000000e+00 : f32
    %66 = vector.broadcast %cst_23 : f32 to vector<2x256xf32>
    %67 = arith.addf %66, %65 : vector<2x256xf32>
    %68 = arith.divf %66, %67 : vector<2x256xf32>
    %69 = vector.shape_cast %68 : vector<2x256xf32> to vector<2x1x256xf32>
    %70 = vector.broadcast %69 : vector<2x1x256xf32> to vector<2x32x256xf32>
    %71 = arith.mulf %56, %70 : vector<2x32x256xf32>
    %c0_24 = arith.constant 0 : index
    %c0_25 = arith.constant 0 : index
    %c0_26 = arith.constant 0 : index
    %72 = vector.load %arg5[%c0_24, %c0_25, %c0_26] : memref<2x32x256xf32, #tpu.memory_space<vmem>>, vector<2x32x256xf32>
    tpu.vector_store %arg5[%c0_24, %c0_25, %c0_26], %71 {strides = array<i32>} : memref<2x32x256xf32, #tpu.memory_space<vmem>>, vector<2x32x256xf32>,
    return
  }
  func.func @transform_0(%arg0: i32) -> (i32, i32, i32) {
    %c0_i32 = arith.constant 0 : i32
    %c0_i32_0 = arith.constant 0 : i32
    %c0_i32_1 = arith.constant 0 : i32
    return %arg0, %c0_i32, %c0_i32_0 : i32, i32, i32
  }
  func.func @transform_1(%arg0: i32) -> (i32, i32) {
    %c0_i32 = arith.constant 0 : i32
    %c0_i32_0 = arith.constant 0 : i32
    %c0_i32_1 = arith.constant 0 : i32
    return %c0_i32, %c0_i32_0 : i32, i32
  }
  func.func @transform_2(%arg0: i32) -> (i32, i32) {
    %c0_i32 = arith.constant 0 : i32
    %c0_i32_0 = arith.constant 0 : i32
    %c0_i32_1 = arith.constant 0 : i32
    return %c0_i32, %c0_i32_0 : i32, i32
  }
  func.func @transform_3(%arg0: i32) -> (i32, i32) {
    %c0_i32 = arith.constant 0 : i32
    %c0_i32_0 = arith.constant 0 : i32
    %c0_i32_1 = arith.constant 0 : i32
    return %c0_i32, %c0_i32_0 : i32, i32
  }
  func.func @transform_4(%arg0: i32) -> (i32, i32, i32) {
    %c0_i32 = arith.constant 0 : i32
    %c0_i32_0 = arith.constant 0 : i32
    %c0_i32_1 = arith.constant 0 : i32
    return %arg0, %c0_i32, %c0_i32_0 : i32, i32, i32
  }
}

</mosaic_0001>

<llo_original>
// kernel: tpu_custom_call.1
$region0: #{tpu_custom_call.1}
  #allocation0 [shape = 'u32[]', space=smem, size = 0x4, offset = 0x4, fixed_abs, tag = 'smem constant byte address 0x4 - core index']
  #allocation1 [shape = 'u32[72,128]{1,0:T(1,128)}', space=vmem, size = 0x9000, scoped, tag = 'internal scratch']
  %s0 = inlined_call_operand.hbm [shape: f32[2,32,256], index: 0, kind: input, shape index: {}, may-alias: {0,4}]
  %s1 = inlined_call_operand.vmem [shape: f32[32,2], index: 1, kind: input, shape index: {}]
  %s2 = inlined_call_operand.vmem [shape: f32[32,2], index: 2, kind: input, shape index: {}]
  %s3 = inlined_call_operand.hbm [shape: f32[512,256], index: 3, kind: input, shape index: {}]
  %s4 = inlined_call_operand.hbm [shape: f32[2,32,256], index: 4, kind: output, shape index: {}, may-alias: {0,4}]
  %s5 = sld [smem:[#allocation0]]
  $region34: #{tpu_custom_call.1} parent=0
    _
  %s7 = ssub.s32 1, %s5
  %s8 = scalar_select 0, %s7, %s5
  $region1: #{tpu_custom_call.1} parent=0
    #allocation2 [shape = 'u8[65536]{0}', space=vmem, size = 0x10000, scoped, tag = 'input window, operand 0, single buffered']
    #allocation3 [shape = 's32[1]{0}', space=sflag, size = 0x4, scoped, tag = 'scoped memory for tpu_custom_call.1']
    #allocation4 [shape = 's32[1]{0}', space=sflag, size = 0x4, scoped, tag = 'scoped memory for tpu_custom_call.1']
    #allocation5 [shape = 'u8[524288]{0}', space=vmem, size = 0x80000, scoped, tag = 'input window, operand 3, single buffered']
    #allocation6 [shape = 's32[1]{0}', space=sflag, size = 0x4, scoped, tag = 'scoped memory for tpu_custom_call.1']
    #allocation7 [shape = 'u8[65536]{0}', space=vmem, size = 0x10000, scoped, tag = 'output window, operand 0, single buffered']
    %9 = vsyncpa [#allocation3], 0
    %10 = vsyncpa [#allocation6], 0
    %11 = vsyncpa [#allocation4], 0
    // Predicated region
    $region2: #{tpu_custom_call.1} parent=1 // pred_check
      _
    $region3: #{tpu_custom_call.1} parent=1 // pred_check_branch
      %13 = sbr.rel (0) target = $region5
    $region4: #{tpu_custom_call.1} parent=1 // pred_region
      %15 = vsyncadd [#allocation3], 0
      %s16 = sshll.u32 %s0, 4
      %s17 = int_to_ptr.hbm [resolvable:$true] %s16
      %s18 = sshll.u32 [#allocation2], 4
      %s19 = int_to_ptr.vmem [resolvable:$true] %s18
      %24 = dma.hbm_to_vmem [thread:$0]  %s17, 2048, %s19, [#allocation3], 256, 256, 16
    $region5: #{tpu_custom_call.1} parent=1 // pred_fallthru
      _
    // Predicated region
    $region6: #{tpu_custom_call.1} parent=1 // pred_check
      _
    $region7: #{tpu_custom_call.1} parent=1 // pred_check_branch
      %26 = sbr.rel (0) target = $region9
    $region8: #{tpu_custom_call.1} parent=1 // pred_region
      _
    $region9: #{tpu_custom_call.1} parent=1 // pred_fallthru
      _
    // Predicated region
    $region10: #{tpu_custom_call.1} parent=1 // pred_check
      _
    $region11: #{tpu_custom_call.1} parent=1 // pred_check_branch
      %28 = sbr.rel (0) target = $region13
    $region12: #{tpu_custom_call.1} parent=1 // pred_region
      _
    $region13: #{tpu_custom_call.1} parent=1 // pred_fallthru
      _
    // Predicated region
    $region14: #{tpu_custom_call.1} parent=1 // pred_check
      _
    $region15: #{tpu_custom_call.1} parent=1 // pred_check_branch
      %30 = sbr.rel (0) target = $region17
    $region16: #{tpu_custom_call.1} parent=1 // pred_region
      %32 = vsyncadd [#allocation6], 0
      %s33 = sshll.u32 %s3, 4
      %s34 = int_to_ptr.hbm [resolvable:$true] %s33
      %s35 = sshll.u32 [#allocation5], 4
      %s36 = int_to_ptr.vmem [resolvable:$true] %s35
      %41 = dma.hbm_to_vmem [thread:$0]  %s34, 16384, %s36, [#allocation6], 256, 256, 16
    $region17: #{tpu_custom_call.1} parent=1 // pred_fallthru
      _
    // Predicated region
    $region18: #{tpu_custom_call.1} parent=1 // pred_check
      _
    $region19: #{tpu_custom_call.1} parent=1 // pred_check_branch
      %43 = sbr.rel (0) target = $region21
    $region20: #{tpu_custom_call.1} parent=1 // pred_region
      %45 = dma.done [#allocation3], 2048
    $region21: #{tpu_custom_call.1} parent=1 // pred_fallthru
      _
    // Predicated region
    $region22: #{tpu_custom_call.1} parent=1 // pred_check
      _
    $region23: #{tpu_custom_call.1} parent=1 // pred_check_branch
      %47 = sbr.rel (0) target = $region25
    $region24: #{tpu_custom_call.1} parent=1 // pred_region
      %49 = dma.done [#allocation6], 16384
    $region25: #{tpu_custom_call.1} parent=1 // pred_fallthru
      _
    %v50 = vld [vmem:[#allocation2] sm:$0xff]
    %v51 = vld [vmem:[#allocation2 + $0x8] sm:$0xff]
    %v52 = vld [vmem:[#allocation2 + $0x10] sm:$0xff]
    %v53 = vld [vmem:[#allocation2 + $0x18] sm:$0xff]
    %v54 = vld [vmem:[#allocation2 + $0x20] sm:$0xff]
    %v55 = vld [vmem:[#allocation2 + $0x28] sm:$0xff]
    %v56 = vld [vmem:[#allocation2 + $0x30] sm:$0xff]
    %v57 = vld [vmem:[#allocation2 + $0x38] sm:$0xff]
    %v58 = vld [vmem:[#allocation2 + $0x40] sm:$0xff]
    %v59 = vld [vmem:[#allocation2 + $0x48] sm:$0xff]
    %v60 = vld [vmem:[#allocation2 + $0x50] sm:$0xff]
    %v61 = vld [vmem:[#allocation2 + $0x58] sm:$0xff]
    %v62 = vld [vmem:[#allocation2 + $0x60] sm:$0xff]
    %v63 = vld [vmem:[#allocation2 + $0x68] sm:$0xff]
    %v64 = vld [vmem:[#allocation2 + $0x70] sm:$0xff]
    %v65 = vld [vmem:[#allocation2 + $0x78] sm:$0xff]
    %v66 = vld [vmem:[%s1] sm:$0xff]
    %v67 = vld [vmem:[%s1 + $0x8] sm:$0xff]
    %v68 = vld [vmem:[%s1 + $0x10] sm:$0xff]
    %v69 = vld [vmem:[%s1 + $0x18] sm:$0xff]
    %v70 = vld [vmem:[%s2] sm:$0xff]
    %v71 = vld [vmem:[%s2 + $0x8] sm:$0xff]
    %v72 = vld [vmem:[%s2 + $0x10] sm:$0xff]
    %v73 = vld [vmem:[%s2 + $0x18] sm:$0xff]
    %v74 = vadd.f32 %v50, %v51
    %75 = vadd.xlane.f32.xlu0 %v74
    %v76 = vpop.xlane.xlu0 %75
    %v77 = vadd.f32 %v52, %v53
    %78 = vadd.xlane.f32.xlu0 %v77
    %v79 = vpop.xlane.xlu0 %78
    %v80 = vadd.f32 %v54, %v55
    %81 = vadd.xlane.f32.xlu0 %v80
    %v82 = vpop.xlane.xlu0 %81
    %v83 = vadd.f32 %v56, %v57
    %84 = vadd.xlane.f32.xlu0 %v83
    %v85 = vpop.xlane.xlu0 %84
    %v86 = vadd.f32 %v58, %v59
    %87 = vadd.xlane.f32.xlu0 %v86
    %v88 = vpop.xlane.xlu0 %87
    %v89 = vadd.f32 %v60, %v61
    %90 = vadd.xlane.f32.xlu0 %v89
    %v91 = vpop.xlane.xlu0 %90
    %v92 = vadd.f32 %v62, %v63
    %93 = vadd.xlane.f32.xlu0 %v92
    %v94 = vpop.xlane.xlu0 %93
    %v95 = vadd.f32 %v64, %v65
    %96 = vadd.xlane.f32.xlu0 %v95
    %v97 = vpop.xlane.xlu0 %96
    %v98 = vrcp.pop 256.0
    %v99 = vmul.f32 256.0, %v98
    %v100 = vsub.f32 1.0, %v99
    %v101 = vmul.f32 %v98, %v100
    %v102 = vadd.f32 %v98, %v101
    %vm103 = vweird.f32 %v98
    %v104 = vsel %vm103, %v98, %v102
    %v105 = vmul.f32 %v76, %v104
    %v106 = vmul.f32 %v79, %v104
    %v107 = vmul.f32 %v82, %v104
    %v108 = vmul.f32 %v85, %v104
    %v109 = vmul.f32 %v88, %v104
    %v110 = vmul.f32 %v91, %v104
    %v111 = vmul.f32 %v94, %v104
    %v112 = vmul.f32 %v97, %v104
    %v113 = vmax.f32 %v50, %v51
    %114 = vmax.xlane.f32.xlu0 %v113
    %v115 = vpop.xlane.xlu0 %114
    %v116 = vmax.f32 %v52, %v53
    %117 = vmax.xlane.f32.xlu0 %v116
    %v118 = vpop.xlane.xlu0 %117
    %v119 = vmax.f32 %v54, %v55
    %120 = vmax.xlane.f32.xlu0 %v119
    %v121 = vpop.xlane.xlu0 %120
    %v122 = vmax.f32 %v56, %v57
    %123 = vmax.xlane.f32.xlu0 %v122
    %v124 = vpop.xlane.xlu0 %123
    %v125 = vmax.f32 %v58, %v59
    %126 = vmax.xlane.f32.xlu0 %v125
    %v127 = vpop.xlane.xlu0 %126
    %v128 = vmax.f32 %v60, %v61
    %129 = vmax.xlane.f32.xlu0 %v128
    %v130 = vpop.xlane.xlu0 %129
    %v131 = vmax.f32 %v62, %v63
    %132 = vmax.xlane.f32.xlu0 %v131
    %v133 = vpop.xlane.xlu0 %132
    %v134 = vmax.f32 %v64, %v65
    %135 = vmax.xlane.f32.xlu0 %v134
    %v136 = vpop.xlane.xlu0 %135
    %v137 = vmul.f32 %v105, %v66
    %v138 = vmul.f32 %v106, %v67
    %v139 = vmul.f32 %v107, %v68
    %v140 = vmul.f32 %v108, %v69
    %v141 = vmul.f32 %v109, %v66
    %v142 = vmul.f32 %v110, %v67
    %v143 = vmul.f32 %v111, %v68
    %v144 = vmul.f32 %v112, %v69
    %vm145 = vcmask 7168
    %v146 = vsel %vm145, %v137, 0.0
    %v147 = vsel %vm145, %v138, 0.0
    %v148 = vadd.f32 %v146, %v147
    %v149 = vsel %vm145, %v139, 0.0
    %v150 = vadd.f32 %v148, %v149
    %v151 = vsel %vm145, %v140, 0.0
    %v152 = vadd.f32 %v150, %v151
    %v153 = vrot.slane %v152, 4
    %v154 = vadd.f32 %v152, %v153
    %v155 = vrot.slane %v154, 2
    %v156 = vadd.f32 %v154, %v155
    %v157 = vrot.slane %v156, 1
    %v158 = vadd.f32 %v156, %v157
    %v159 = vsel %vm145, %v141, 0.0
    %v160 = vsel %vm145, %v142, 0.0
    %v161 = vadd.f32 %v159, %v160
    %v162 = vsel %vm145, %v143, 0.0
    %v163 = vadd.f32 %v161, %v162
    %v164 = vsel %vm145, %v144, 0.0
    %v165 = vadd.f32 %v163, %v164
    %v166 = vrot.slane %v165, 4
    %v167 = vadd.f32 %v165, %v166
    %v168 = vrot.slane %v167, 2
    %v169 = vadd.f32 %v167, %v168
    %v170 = vrot.slane %v169, 1
    %v171 = vadd.f32 %v169, %v170
    %v172 = vmax.f32 %v158, 0.0
    %v173 = vmax.f32 %v171, 0.0
    %v174 = vmul.f32 %v115, %v66
    %v175 = vmul.f32 %v118, %v67
    %v176 = vmul.f32 %v121, %v68
    %v177 = vmul.f32 %v124, %v69
    %v178 = vmul.f32 %v127, %v66
    %v179 = vmul.f32 %v130, %v67
    %v180 = vmul.f32 %v133, %v68
    %v181 = vmul.f32 %v136, %v69
    %v182 = vsel %vm145, %v174, 0.0
    %v183 = vsel %vm145, %v175, 0.0
    %v184 = vadd.f32 %v182, %v183
    %v185 = vsel %vm145, %v176, 0.0
    %v186 = vadd.f32 %v184, %v185
    %v187 = vsel %vm145, %v177, 0.0
    %v188 = vadd.f32 %v186, %v187
    %v189 = vrot.slane %v188, 4
    %v190 = vadd.f32 %v188, %v189
    %v191 = vrot.slane %v190, 2
    %v192 = vadd.f32 %v190, %v191
    %v193 = vrot.slane %v192, 1
    %v194 = vadd.f32 %v192, %v193
    %v195 = vsel %vm145, %v178, 0.0
    %v196 = vsel %vm145, %v179, 0.0
    %v197 = vadd.f32 %v195, %v196
    %v198 = vsel %vm145, %v180, 0.0
    %v199 = vadd.f32 %v197, %v198
    %v200 = vsel %vm145, %v181, 0.0
    %v201 = vadd.f32 %v199, %v200
    %v202 = vrot.slane %v201, 4
    %v203 = vadd.f32 %v201, %v202
    %v204 = vrot.slane %v203, 2
    %v205 = vadd.f32 %v203, %v204
    %v206 = vrot.slane %v205, 1
    %v207 = vadd.f32 %v205, %v206
    %v208 = vmax.f32 %v194, 0.0
    %v209 = vmax.f32 %v207, 0.0
    %v210 = vadd.f32 %v172, %v208
    %v211 = vadd.f32 %v173, %v209
    %v212 = vmul.f32 %v210, %v70
    %v213 = vmul.f32 %v210, %v71
    %v214 = vmul.f32 %v210, %v72
    %v215 = vmul.f32 %v210, %v73
    %v216 = vmul.f32 %v211, %v70
    %v217 = vmul.f32 %v211, %v71
    %v218 = vmul.f32 %v211, %v72
    %v219 = vmul.f32 %v211, %v73
    %vm220 = vcmask 15368
    %v221 = vsel %vm220, %v137, 0.0
    %v222 = vsel %vm220, %v138, 0.0
    %v223 = vadd.f32 %v221, %v222
    %v224 = vsel %vm220, %v139, 0.0
    %v225 = vadd.f32 %v223, %v224
    %v226 = vsel %vm220, %v140, 0.0
    %v227 = vadd.f32 %v225, %v226
    %v228 = vrot.slane %v227, 4
    %v229 = vadd.f32 %v227, %v228
    %v230 = vrot.slane %v229, 2
    %v231 = vadd.f32 %v229, %v230
    %v232 = vrot.slane %v231, 1
    %v233 = vadd.f32 %v231, %v232
    %v234 = vsel %vm220, %v141, 0.0
    %v235 = vsel %vm220, %v142, 0.0
    %v236 = vadd.f32 %v234, %v235
    %v237 = vsel %vm220, %v143, 0.0
    %v238 = vadd.f32 %v236, %v237
    %v239 = vsel %vm220, %v144, 0.0
    %v240 = vadd.f32 %v238, %v239
    %v241 = vrot.slane %v240, 4
    %v242 = vadd.f32 %v240, %v241
    %v243 = vrot.slane %v242, 2
    %v244 = vadd.f32 %v242, %v243
    %v245 = vrot.slane %v244, 1
    %v246 = vadd.f32 %v244, %v245
    %v247 = vmax.f32 %v233, 0.0
    %v248 = vmax.f32 %v246, 0.0
    %v249 = vsel %vm220, %v174, 0.0
    %v250 = vsel %vm220, %v175, 0.0
    %v251 = vadd.f32 %v249, %v250
    %v252 = vsel %vm220, %v176, 0.0
    %v253 = vadd.f32 %v251, %v252
    %v254 = vsel %vm220, %v177, 0.0
    %v255 = vadd.f32 %v253, %v254
    %v256 = vrot.slane %v255, 4
    %v257 = vadd.f32 %v255, %v256
    %v258 = vrot.slane %v257, 2
    %v259 = vadd.f32 %v257, %v258
    %v260 = vrot.slane %v259, 1
    %v261 = vadd.f32 %v259, %v260
    %v262 = vsel %vm220, %v178, 0.0
    %v263 = vsel %vm220, %v179, 0.0
    %v264 = vadd.f32 %v262, %v263
    %v265 = vsel %vm220, %v180, 0.0
    %v266 = vadd.f32 %v264, %v265
    %v267 = vsel %vm220, %v181, 0.0
    %v268 = vadd.f32 %v266, %v267
    %v269 = vrot.slane %v268, 4
    %v270 = vadd.f32 %v268, %v269
    %v271 = vrot.slane %v270, 2
    %v272 = vadd.f32 %v270, %v271
    %v273 = vrot.slane %v272, 1
    %v274 = vadd.f32 %v272, %v273
    %v275 = vmax.f32 %v261, 0.0
    %v276 = vmax.f32 %v274, 0.0
    %v277 = vadd.f32 %v247, %v275
    %v278 = vadd.f32 %v248, %v276
    %v279 = vmul.f32 %v277, %v70
    %v280 = vmul.f32 %v277, %v71
    %v281 = vmul.f32 %v277, %v72
    %v282 = vmul.f32 %v277, %v73
    %v283 = vmul.f32 %v278, %v70
    %v284 = vmul.f32 %v278, %v71
    %v285 = vmul.f32 %v278, %v72
    %v286 = vmul.f32 %v278, %v73
    %295 = vrot.lane.b32.xlu0 %v279, 127
    %v296 = vpop.permute.xlu0 %295
    %297 = vrot.lane.b32.xlu0 %v280, 127
    %v298 = vpop.permute.xlu0 %297
    %299 = vrot.lane.b32.xlu0 %v281, 127
    %v300 = vpop.permute.xlu0 %299
    %301 = vrot.lane.b32.xlu0 %v282, 127
    %v302 = vpop.permute.xlu0 %301
    %303 = vrot.lane.b32.xlu0 %v283, 127
    %v304 = vpop.permute.xlu0 %303
    %305 = vrot.lane.b32.xlu0 %v284, 127
    %v306 = vpop.permute.xlu0 %305
    %307 = vrot.lane.b32.xlu0 %v285, 127
    %v308 = vpop.permute.xlu0 %307
    %309 = vrot.lane.b32.xlu0 %v286, 127
    %v310 = vpop.permute.xlu0 %309
    %v319 = vadd.f32 %v212, %v296
    %v320 = vadd.f32 %v213, %v298
    %v321 = vadd.f32 %v214, %v300
    %v322 = vadd.f32 %v215, %v302
    %v323 = vadd.f32 %v216, %v304
    %v324 = vadd.f32 %v217, %v306
    %v325 = vadd.f32 %v218, %v308
    %v326 = vadd.f32 %v219, %v310
    %v327 = vxor.u32 %v319, 2147483648
    %v328 = vxor.u32 %v320, 2147483648
    %v329 = vxor.u32 %v321, 2147483648
    %v330 = vxor.u32 %v322, 2147483648
    %v331 = vxor.u32 %v323, 2147483648
    %v332 = vxor.u32 %v324, 2147483648
    %v333 = vxor.u32 %v325, 2147483648
    %v334 = vxor.u32 %v326, 2147483648
    %v335 = vmul.f32 %v327, 1.442695
    %v336 = vpow.pop %v335
    %v337 = vmul.f32 %v328, 1.442695
    %v338 = vpow.pop %v337
    %v339 = vmul.f32 %v329, 1.442695
    %v340 = vpow.pop %v339
    %v341 = vmul.f32 %v330, 1.442695
    %v342 = vpow.pop %v341
    %v343 = vmul.f32 %v331, 1.442695
    %v344 = vpow.pop %v343
    %v345 = vmul.f32 %v332, 1.442695
    %v346 = vpow.pop %v345
    %v347 = vmul.f32 %v333, 1.442695
    %v348 = vpow.pop %v347
    %v349 = vmul.f32 %v334, 1.442695
    %v350 = vpow.pop %v349
    %v351 = vadd.f32 %v336, 1.0
    %v352 = vadd.f32 %v338, 1.0
    %v353 = vadd.f32 %v340, 1.0
    %v354 = vadd.f32 %v342, 1.0
    %v355 = vadd.f32 %v344, 1.0
    %v356 = vadd.f32 %v346, 1.0
    %v357 = vadd.f32 %v348, 1.0
    %v358 = vadd.f32 %v350, 1.0
    %v359 = vrcp.pop %v351
    %v360 = vmul.f32 %v351, %v359
    %v361 = vsub.f32 1.0, %v360
    %v362 = vmul.f32 %v359, %v361
    %v363 = vadd.f32 %v359, %v362
    %vm364 = vweird.f32 %v351
    %vm365 = vweird.f32 %v359
    %vm366 = vmor %vm364, %vm365
    %v367 = vsel %vm366, %v359, %v363
    %v368 = vand.u32 2147483647, %v351
    %vm369 = vcmp.eq.f32.partialorder %v368, 8.507059e+37
    %v370 = vand.u32 %v351, 2147483648
    %v371 = vor.u32 1.1754944e-38, %v370
    %v372 = vsel %vm369, %v371, %v367
    %v373 = vmul.f32 1.0, %v372
    %v374 = vrcp.pop %v352
    %v375 = vmul.f32 %v352, %v374
    %v376 = vsub.f32 1.0, %v375
    %v377 = vmul.f32 %v374, %v376
    %v378 = vadd.f32 %v374, %v377
    %vm379 = vweird.f32 %v352
    %vm380 = vweird.f32 %v374
    %vm381 = vmor %vm379, %vm380
    %v382 = vsel %vm381, %v374, %v378
    %v383 = vand.u32 2147483647, %v352
    %vm384 = vcmp.eq.f32.partialorder %v383, 8.507059e+37
    %v385 = vand.u32 %v352, 2147483648
    %v386 = vor.u32 1.1754944e-38, %v385
    %v387 = vsel %vm384, %v386, %v382
    %v388 = vmul.f32 1.0, %v387
    %v389 = vrcp.pop %v353
    %v390 = vmul.f32 %v353, %v389
    %v391 = vsub.f32 1.0, %v390
    %v392 = vmul.f32 %v389, %v391
    %v393 = vadd.f32 %v389, %v392
    %vm394 = vweird.f32 %v353
    %vm395 = vweird.f32 %v389
    %vm396 = vmor %vm394, %vm395
    %v397 = vsel %vm396, %v389, %v393
    %v398 = vand.u32 2147483647, %v353
    %vm399 = vcmp.eq.f32.partialorder %v398, 8.507059e+37
    %v400 = vand.u32 %v353, 2147483648
    %v401 = vor.u32 1.1754944e-38, %v400
    %v402 = vsel %vm399, %v401, %v397
    %v403 = vmul.f32 1.0, %v402
    %v404 = vrcp.pop %v354
    %v405 = vmul.f32 %v354, %v404
    %v406 = vsub.f32 1.0, %v405
    %v407 = vmul.f32 %v404, %v406
    %v408 = vadd.f32 %v404, %v407
    %vm409 = vweird.f32 %v354
    %vm410 = vweird.f32 %v404
    %vm411 = vmor %vm409, %vm410
    %v412 = vsel %vm411, %v404, %v408
    %v413 = vand.u32 2147483647, %v354
    %vm414 = vcmp.eq.f32.partialorder %v413, 8.507059e+37
    %v415 = vand.u32 %v354, 2147483648
    %v416 = vor.u32 1.1754944e-38, %v415
    %v417 = vsel %vm414, %v416, %v412
    %v418 = vmul.f32 1.0, %v417
    %v419 = vrcp.pop %v355
    %v420 = vmul.f32 %v355, %v419
    %v421 = vsub.f32 1.0, %v420
    %v422 = vmul.f32 %v419, %v421
    %v423 = vadd.f32 %v419, %v422
    %vm424 = vweird.f32 %v355
    %vm425 = vweird.f32 %v419
    %vm426 = vmor %vm424, %vm425
    %v427 = vsel %vm426, %v419, %v423
    %v428 = vand.u32 2147483647, %v355
    %vm429 = vcmp.eq.f32.partialorder %v428, 8.507059e+37
    %v430 = vand.u32 %v355, 2147483648
    %v431 = vor.u32 1.1754944e-38, %v430
    %v432 = vsel %vm429, %v431, %v427
    %v433 = vmul.f32 1.0, %v432
    %v434 = vrcp.pop %v356
    %v435 = vmul.f32 %v356, %v434
    %v436 = vsub.f32 1.0, %v435
    %v437 = vmul.f32 %v434, %v436
    %v438 = vadd.f32 %v434, %v437
    %vm439 = vweird.f32 %v356
    %vm440 = vweird.f32 %v434
    %vm441 = vmor %vm439, %vm440
    %v442 = vsel %vm441, %v434, %v438
    %v443 = vand.u32 2147483647, %v356
    %vm444 = vcmp.eq.f32.partialorder %v443, 8.507059e+37
    %v445 = vand.u32 %v356, 2147483648
    %v446 = vor.u32 1.1754944e-38, %v445
    %v447 = vsel %vm444, %v446, %v442
    %v448 = vmul.f32 1.0, %v447
    %v449 = vrcp.pop %v357
    %v450 = vmul.f32 %v357, %v449
    %v451 = vsub.f32 1.0, %v450
    %v452 = vmul.f32 %v449, %v451
    %v453 = vadd.f32 %v449, %v452
    %vm454 = vweird.f32 %v357
    %vm455 = vweird.f32 %v449
    %vm456 = vmor %vm454, %vm455
    %v457 = vsel %vm456, %v449, %v453
    %v458 = vand.u32 2147483647, %v357
    %vm459 = vcmp.eq.f32.partialorder %v458, 8.507059e+37
    %v460 = vand.u32 %v357, 2147483648
    %v461 = vor.u32 1.1754944e-38, %v460
    %v462 = vsel %vm459, %v461, %v457
    %v463 = vmul.f32 1.0, %v462
    %v464 = vrcp.pop %v358
    %v465 = vmul.f32 %v358, %v464
    %v466 = vsub.f32 1.0, %v465
    %v467 = vmul.f32 %v464, %v466
    %v468 = vadd.f32 %v464, %v467
    %vm469 = vweird.f32 %v358
    %vm470 = vweird.f32 %v464
    %vm471 = vmor %vm469, %vm470
    %v472 = vsel %vm471, %v464, %v468
    %v473 = vand.u32 2147483647, %v358
    %vm474 = vcmp.eq.f32.partialorder %v473, 8.507059e+37
    %v475 = vand.u32 %v358, 2147483648
    %v476 = vor.u32 1.1754944e-38, %v475
    %v477 = vsel %vm474, %v476, %v472
    %v478 = vmul.f32 1.0, %v477
    %480 = vset.pattern.permute.xlu0 0
    %481 = vperm.xlu0 %480, %v373
    %v482 = vpop.permute.xlu0 %481
    %485 = vset.pattern.permute.xlu0 0
    %486 = vperm.xlu0 %485, %v388
    %v487 = vpop.permute.xlu0 %486
    %490 = vset.pattern.permute.xlu0 0
    %491 = vperm.xlu0 %490, %v403
    %v492 = vpop.permute.xlu0 %491
    %495 = vset.pattern.permute.xlu0 0
    %496 = vperm.xlu0 %495, %v418
    %v497 = vpop.permute.xlu0 %496
    %500 = vset.pattern.permute.xlu0 0
    %501 = vperm.xlu0 %500, %v433
    %v502 = vpop.permute.xlu0 %501
    %505 = vset.pattern.permute.xlu0 0
    %506 = vperm.xlu0 %505, %v448
    %v507 = vpop.permute.xlu0 %506
    %510 = vset.pattern.permute.xlu0 0
    %511 = vperm.xlu0 %510, %v463
    %v512 = vpop.permute.xlu0 %511
    %515 = vset.pattern.permute.xlu0 0
    %516 = vperm.xlu0 %515, %v478
    %v517 = vpop.permute.xlu0 %516
    %v519 = vmul.f32 %v50, %v482
    %v520 = vmul.f32 %v51, %v482
    %v521 = vmul.f32 %v52, %v487
    %v522 = vmul.f32 %v53, %v487
    %v523 = vmul.f32 %v54, %v492
    %v524 = vmul.f32 %v55, %v492
    %v525 = vmul.f32 %v56, %v497
    %v526 = vmul.f32 %v57, %v497
    %v527 = vmul.f32 %v58, %v502
    %v528 = vmul.f32 %v59, %v502
    %v529 = vmul.f32 %v60, %v507
    %v530 = vmul.f32 %v61, %v507
    %v531 = vmul.f32 %v62, %v512
    %v532 = vmul.f32 %v63, %v512
    %v533 = vmul.f32 %v64, %v517
    %v534 = vmul.f32 %v65, %v517
    %v535 = vadd.f32 %v519, %v521
    %v536 = vadd.f32 %v535, %v523
    %v537 = vadd.f32 %v536, %v525
    %v538 = vrot.slane %v537, 4
    %v539 = vadd.f32 %v537, %v538
    %v540 = vrot.slane %v539, 2
    %v541 = vadd.f32 %v539, %v540
    %v542 = vrot.slane %v541, 1
    %v543 = vadd.f32 %v541, %v542
    %v544 = vadd.f32 %v520, %v522
    %v545 = vadd.f32 %v544, %v524
    %v546 = vadd.f32 %v545, %v526
    %v547 = vrot.slane %v546, 4
    %v548 = vadd.f32 %v546, %v547
    %v549 = vrot.slane %v548, 2
    %v550 = vadd.f32 %v548, %v549
    %v551 = vrot.slane %v550, 1
    %v552 = vadd.f32 %v550, %v551
    %v553 = vadd.f32 %v527, %v529
    %v554 = vadd.f32 %v553, %v531
    %v555 = vadd.f32 %v554, %v533
    %v556 = vrot.slane %v555, 4
    %v557 = vadd.f32 %v555, %v556
    %v558 = vrot.slane %v557, 2
    %v559 = vadd.f32 %v557, %v558
    %v560 = vrot.slane %v559, 1
    %v561 = vadd.f32 %v559, %v560
    %v562 = vadd.f32 %v528, %v530
    %v563 = vadd.f32 %v562, %v532
    %v564 = vadd.f32 %v563, %v534
    %v565 = vrot.slane %v564, 4
    %v566 = vadd.f32 %v564, %v565
    %v567 = vrot.slane %v566, 2
    %v568 = vadd.f32 %v566, %v567
    %v569 = vrot.slane %v568, 1
    %v570 = vadd.f32 %v568, %v569
    %v571 = vrcp.pop 32.0
    %v572 = vmul.f32 32.0, %v571
    %v573 = vsub.f32 1.0, %v572
    %v574 = vmul.f32 %v571, %v573
    %v575 = vadd.f32 %v571, %v574
    %vm576 = vweird.f32 %v571
    %v577 = vsel %vm576, %v571, %v575
    %v578 = vmul.f32 %v543, %v577
    %v579 = vmul.f32 %v552, %v577
    %v580 = vmul.f32 %v561, %v577
    %v581 = vmul.f32 %v570, %v577
    %v582 = vmax.f32 %v519, %v521
    %v583 = vmax.f32 %v582, %v523
    %v584 = vmax.f32 %v583, %v525
    %v585 = vrot.slane %v584, 4
    %v586 = vmax.f32 %v584, %v585
    %v587 = vrot.slane %v586, 2
    %v588 = vmax.f32 %v586, %v587
    %v589 = vrot.slane %v588, 1
    %v590 = vmax.f32 %v588, %v589
    %v591 = vmax.f32 %v520, %v522
    %v592 = vmax.f32 %v591, %v524
    %v593 = vmax.f32 %v592, %v526
    %v594 = vrot.slane %v593, 4
    %v595 = vmax.f32 %v593, %v594
    %v596 = vrot.slane %v595, 2
    %v597 = vmax.f32 %v595, %v596
    %v598 = vrot.slane %v597, 1
    %v599 = vmax.f32 %v597, %v598
    %v600 = vmax.f32 %v527, %v529
    %v601 = vmax.f32 %v600, %v531
    %v602 = vmax.f32 %v601, %v533
    %v603 = vrot.slane %v602, 4
    %v604 = vmax.f32 %v602, %v603
    %v605 = vrot.slane %v604, 2
    %v606 = vmax.f32 %v604, %v605
    %v607 = vrot.slane %v606, 1
    %v608 = vmax.f32 %v606, %v607
    %v609 = vmax.f32 %v528, %v530
    %v610 = vmax.f32 %v609, %v532
    %v611 = vmax.f32 %v610, %v534
    %v612 = vrot.slane %v611, 4
    %v613 = vmax.f32 %v611, %v612
    %v614 = vrot.slane %v613, 2
    %v615 = vmax.f32 %v613, %v614
    %v616 = vrot.slane %v615, 1
    %v617 = vmax.f32 %v615, %v616
    %vm622 = vcmask 1041409
    %v623 = vsel %vm622, %v580, %v578
    %v624 = vsel %vm622, %v581, %v579
    %v631 = vsel %vm622, %v608, %v590
    %v632 = vsel %vm622, %v617, %v599
    %v635 = vld [vmem:[#allocation5] sm:$0xff]
    %v636 = vld [vmem:[#allocation5 + $0x8] sm:$0xff]
    %v637 = vld [vmem:[#allocation5 + $0x10] sm:$0xff]
    %v638 = vld [vmem:[#allocation5 + $0x18] sm:$0xff]
    %v639 = vld [vmem:[#allocation5 + $0x20] sm:$0xff]
    %v640 = vld [vmem:[#allocation5 + $0x28] sm:$0xff]
    %v641 = vld [vmem:[#allocation5 + $0x30] sm:$0xff]
    %v642 = vld [vmem:[#allocation5 + $0x38] sm:$0xff]
    %v643 = vld [vmem:[#allocation5 + $0x40] sm:$0xff]
    %v644 = vld [vmem:[#allocation5 + $0x48] sm:$0xff]
    %v645 = vld [vmem:[#allocation5 + $0x50] sm:$0xff]
    %v646 = vld [vmem:[#allocation5 + $0x58] sm:$0xff]
    %v647 = vld [vmem:[#allocation5 + $0x60] sm:$0xff]
    %v648 = vld [vmem:[#allocation5 + $0x68] sm:$0xff]
    %v649 = vld [vmem:[#allocation5 + $0x70] sm:$0xff]
    %v650 = vld [vmem:[#allocation5 + $0x78] sm:$0xff]
    %v651 = vld [vmem:[#allocation5 + $0x80] sm:$0xff]
    %v652 = vld [vmem:[#allocation5 + $0x88] sm:$0xff]
    %v653 = vld [vmem:[#allocation5 + $0x90] sm:$0xff]
    %v654 = vld [vmem:[#allocation5 + $0x98] sm:$0xff]
    %v655 = vld [vmem:[#allocation5 + $0xa0] sm:$0xff]
    %v656 = vld [vmem:[#allocation5 + $0xa8] sm:$0xff]
    %v657 = vld [vmem:[#allocation5 + $0xb0] sm:$0xff]
    %v658 = vld [vmem:[#allocation5 + $0xb8] sm:$0xff]
    %v659 = vld [vmem:[#allocation5 + $0xc0] sm:$0xff]
    %v660 = vld [vmem:[#allocation5 + $0xc8] sm:$0xff]
    %v661 = vld [vmem:[#allocation5 + $0xd0] sm:$0xff]
    %v662 = vld [vmem:[#allocation5 + $0xd8] sm:$0xff]
    %v663 = vld [vmem:[#allocation5 + $0xe0] sm:$0xff]
    %v664 = vld [vmem:[#allocation5 + $0xe8] sm:$0xff]
    %v665 = vld [vmem:[#allocation5 + $0xf0] sm:$0xff]
    %v666 = vld [vmem:[#allocation5 + $0xf8] sm:$0xff]
    %v667 = vld [vmem:[#allocation5 + $0x100] sm:$0xff]
    %v668 = vld [vmem:[#allocation5 + $0x108] sm:$0xff]
    %v669 = vld [vmem:[#allocation5 + $0x110] sm:$0xff]
    %v670 = vld [vmem:[#allocation5 + $0x118] sm:$0xff]
    %v671 = vld [vmem:[#allocation5 + $0x120] sm:$0xff]
    %v672 = vld [vmem:[#allocation5 + $0x128] sm:$0xff]
    %v673 = vld [vmem:[#allocation5 + $0x130] sm:$0xff]
    %v674 = vld [vmem:[#allocation5 + $0x138] sm:$0xff]
    %v675 = vld [vmem:[#allocation5 + $0x140] sm:$0xff]
    %v676 = vld [vmem:[#allocation5 + $0x148] sm:$0xff]
    %v677 = vld [vmem:[#allocation5 + $0x150] sm:$0xff]
    %v678 = vld [vmem:[#allocation5 + $0x158] sm:$0xff]
    %v679 = vld [vmem:[#allocation5 + $0x160] sm:$0xff]
    %v680 = vld [vmem:[#allocation5 + $0x168] sm:$0xff]
    %v681 = vld [vmem:[#allocation5 + $0x170] sm:$0xff]
    %v682 = vld [vmem:[#allocation5 + $0x178] sm:$0xff]
    %v683 = vld [vmem:[#allocation5 + $0x180] sm:$0xff]
    %v684 = vld [vmem:[#allocation5 + $0x188] sm:$0xff]
    %v685 = vld [vmem:[#allocation5 + $0x190] sm:$0xff]
    %v686 = vld [vmem:[#allocation5 + $0x198] sm:$0xff]
    %v687 = vld [vmem:[#allocation5 + $0x1a0] sm:$0xff]
    %v688 = vld [vmem:[#allocation5 + $0x1a8] sm:$0xff]
    %v689 = vld [vmem:[#allocation5 + $0x1b0] sm:$0xff]
    %v690 = vld [vmem:[#allocation5 + $0x1b8] sm:$0xff]
    %v691 = vld [vmem:[#allocation5 + $0x1c0] sm:$0xff]
    %v692 = vld [vmem:[#allocation5 + $0x1c8] sm:$0xff]
    %v693 = vld [vmem:[#allocation5 + $0x1d0] sm:$0xff]
    %v694 = vld [vmem:[#allocation5 + $0x1d8] sm:$0xff]
    %v695 = vld [vmem:[#allocation5 + $0x1e0] sm:$0xff]
    %v696 = vld [vmem:[#allocation5 + $0x1e8] sm:$0xff]
    %v697 = vld [vmem:[#allocation5 + $0x1f0] sm:$0xff]
    %v698 = vld [vmem:[#allocation5 + $0x1f8] sm:$0xff]
    %v699 = vld [vmem:[#allocation5 + $0x200] sm:$0xff]
    %v700 = vld [vmem:[#allocation5 + $0x208] sm:$0xff]
    %v701 = vld [vmem:[#allocation5 + $0x210] sm:$0xff]
    %v702 = vld [vmem:[#allocation5 + $0x218] sm:$0xff]
    %v703 = vld [vmem:[#allocation5 + $0x220] sm:$0xff]
    %v704 = vld [vmem:[#allocation5 + $0x228] sm:$0xff]
    %v705 = vld [vmem:[#allocation5 + $0x230] sm:$0xff]
    %v706 = vld [vmem:[#allocation5 + $0x238] sm:$0xff]
    %v707 = vld [vmem:[#allocation5 + $0x240] sm:$0xff]
    %v708 = vld [vmem:[#allocation5 + $0x248] sm:$0xff]
    %v709 = vld [vmem:[#allocation5 + $0x250] sm:$0xff]
    %v710 = vld [vmem:[#allocation5 + $0x258] sm:$0xff]
    %v711 = vld [vmem:[#allocation5 + $0x260] sm:$0xff]
    %v712 = vld [vmem:[#allocation5 + $0x268] sm:$0xff]
    %v713 = vld [vmem:[#allocation5 + $0x270] sm:$0xff]
    %v714 = vld [vmem:[#allocation5 + $0x278] sm:$0xff]
    %v715 = vld [vmem:[#allocation5 + $0x280] sm:$0xff]
    %v716 = vld [vmem:[#allocation5 + $0x288] sm:$0xff]
    %v717 = vld [vmem:[#allocation5 + $0x290] sm:$0xff]
    %v718 = vld [vmem:[#allocation5 + $0x298] sm:$0xff]
    %v719 = vld [vmem:[#allocation5 + $0x2a0] sm:$0xff]
    %v720 = vld [vmem:[#allocation5 + $0x2a8] sm:$0xff]
    %v721 = vld [vmem:[#allocation5 + $0x2b0] sm:$0xff]
    %v722 = vld [vmem:[#allocation5 + $0x2b8] sm:$0xff]
    %v723 = vld [vmem:[#allocation5 + $0x2c0] sm:$0xff]
    %v724 = vld [vmem:[#allocation5 + $0x2c8] sm:$0xff]
    %v725 = vld [vmem:[#allocation5 + $0x2d0] sm:$0xff]
    %v726 = vld [vmem:[#allocation5 + $0x2d8] sm:$0xff]
    %v727 = vld [vmem:[#allocation5 + $0x2e0] sm:$0xff]
    %v728 = vld [vmem:[#allocation5 + $0x2e8] sm:$0xff]
    %v729 = vld [vmem:[#allocation5 + $0x2f0] sm:$0xff]
    %v730 = vld [vmem:[#allocation5 + $0x2f8] sm:$0xff]
    %v731 = vld [vmem:[#allocation5 + $0x300] sm:$0xff]
    %v732 = vld [vmem:[#allocation5 + $0x308] sm:$0xff]
    %v733 = vld [vmem:[#allocation5 + $0x310] sm:$0xff]
    %v734 = vld [vmem:[#allocation5 + $0x318] sm:$0xff]
    %v735 = vld [vmem:[#allocation5 + $0x320] sm:$0xff]
    %v736 = vld [vmem:[#allocation5 + $0x328] sm:$0xff]
    %v737 = vld [vmem:[#allocation5 + $0x330] sm:$0xff]
    %v738 = vld [vmem:[#allocation5 + $0x338] sm:$0xff]
    %v739 = vld [vmem:[#allocation5 + $0x340] sm:$0xff]
    %v740 = vld [vmem:[#allocation5 + $0x348] sm:$0xff]
    %v741 = vld [vmem:[#allocation5 + $0x350] sm:$0xff]
    %v742 = vld [vmem:[#allocation5 + $0x358] sm:$0xff]
    %v743 = vld [vmem:[#allocation5 + $0x360] sm:$0xff]
    %v744 = vld [vmem:[#allocation5 + $0x368] sm:$0xff]
    %v745 = vld [vmem:[#allocation5 + $0x370] sm:$0xff]
    %v746 = vld [vmem:[#allocation5 + $0x378] sm:$0xff]
    %v747 = vld [vmem:[#allocation5 + $0x380] sm:$0xff]
    %v748 = vld [vmem:[#allocation5 + $0x388] sm:$0xff]
    %v749 = vld [vmem:[#allocation5 + $0x390] sm:$0xff]
    %v750 = vld [vmem:[#allocation5 + $0x398] sm:$0xff]
    %v751 = vld [vmem:[#allocation5 + $0x3a0] sm:$0xff]
    %v752 = vld [vmem:[#allocation5 + $0x3a8] sm:$0xff]
    %v753 = vld [vmem:[#allocation5 + $0x3b0] sm:$0xff]
    %v754 = vld [vmem:[#allocation5 + $0x3b8] sm:$0xff]
    %v755 = vld [vmem:[#allocation5 + $0x3c0] sm:$0xff]
    %v756 = vld [vmem:[#allocation5 + $0x3c8] sm:$0xff]
    %v757 = vld [vmem:[#allocation5 + $0x3d0] sm:$0xff]
    %v758 = vld [vmem:[#allocation5 + $0x3d8] sm:$0xff]
    %v759 = vld [vmem:[#allocation5 + $0x3e0] sm:$0xff]
    %v760 = vld [vmem:[#allocation5 + $0x3e8] sm:$0xff]
    %v761 = vld [vmem:[#allocation5 + $0x3f0] sm:$0xff]
    %v762 = vld [vmem:[#allocation5 + $0x3f8] sm:$0xff]
    %763 = vmatpush.msra.mxu0 %v665
    %764 = vmatpush.msra.mxu0 %v663
    %765 = vmatpush.msra.mxu0 %v661
    %766 = vmatpush.msra.mxu0 %v659
    %767 = vmatpush.msra.mxu0 %v657
    %768 = vmatpush.msra.mxu0 %v655
    %769 = vmatpush.msra.mxu0 %v653
    %770 = vmatpush.msra.mxu0 %v651
    %771 = vmatpush.msra.mxu0 %v649
    %772 = vmatpush.msra.mxu0 %v647
    %773 = vmatpush.msra.mxu0 %v645
    %774 = vmatpush.msra.mxu0 %v643
    %775 = vmatpush.msra.mxu0 %v641
    %776 = vmatpush.msra.mxu0 %v639
    %777 = vmatpush.msra.mxu0 %v637
    %778 = vmatpush.msra.mxu0 %v635
    %779 = vmatmul.f32.gmra.mxu0 %v623
    %v780 = vpop.f32.mrf.mxu0
    %v781 = vadd.f32 0.0, %v780
    %782 = vdwg.mxu0
    %783 = vmatpush.msra.mxu0 %v697
    %784 = vmatpush.msra.mxu0 %v695
    %785 = vmatpush.msra.mxu0 %v693
    %786 = vmatpush.msra.mxu0 %v691
    %787 = vmatpush.msra.mxu0 %v689
    %788 = vmatpush.msra.mxu0 %v687
    %789 = vmatpush.msra.mxu0 %v685
    %790 = vmatpush.msra.mxu0 %v683
    %791 = vmatpush.msra.mxu0 %v681
    %792 = vmatpush.msra.mxu0 %v679
    %793 = vmatpush.msra.mxu0 %v677
    %794 = vmatpush.msra.mxu0 %v675
    %795 = vmatpush.msra.mxu0 %v673
    %796 = vmatpush.msra.mxu0 %v671
    %797 = vmatpush.msra.mxu0 %v669
    %798 = vmatpush.msra.mxu0 %v667
    %799 = vmatmul.f32.gmra.mxu0 %v624
    %v800 = vpop.f32.mrf.mxu0
    %v801 = vadd.f32 %v781, %v800
    %802 = vdwg.mxu0
    %803 = vmatpush.msra.mxu0 %v729
    %804 = vmatpush.msra.mxu0 %v727
    %805 = vmatpush.msra.mxu0 %v725
    %806 = vmatpush.msra.mxu0 %v723
    %807 = vmatpush.msra.mxu0 %v721
    %808 = vmatpush.msra.mxu0 %v719
    %809 = vmatpush.msra.mxu0 %v717
    %810 = vmatpush.msra.mxu0 %v715
    %811 = vmatpush.msra.mxu0 %v713
    %812 = vmatpush.msra.mxu0 %v711
    %813 = vmatpush.msra.mxu0 %v709
    %814 = vmatpush.msra.mxu0 %v707
    %815 = vmatpush.msra.mxu0 %v705
    %816 = vmatpush.msra.mxu0 %v703
    %817 = vmatpush.msra.mxu0 %v701
    %818 = vmatpush.msra.mxu0 %v699
    %819 = vmatmul.f32.gmra.mxu0 %v631
    %v820 = vpop.f32.mrf.mxu0
    %v821 = vadd.f32 %v801, %v820
    %822 = vdwg.mxu0
    %823 = vmatpush.msra.mxu0 %v761
    %824 = vmatpush.msra.mxu0 %v759
    %825 = vmatpush.msra.mxu0 %v757
    %826 = vmatpush.msra.mxu0 %v755
    %827 = vmatpush.msra.mxu0 %v753
    %828 = vmatpush.msra.mxu0 %v751
    %829 = vmatpush.msra.mxu0 %v749
    %830 = vmatpush.msra.mxu0 %v747
    %831 = vmatpush.msra.mxu0 %v745
    %832 = vmatpush.msra.mxu0 %v743
    %833 = vmatpush.msra.mxu0 %v741
    %834 = vmatpush.msra.mxu0 %v739
    %835 = vmatpush.msra.mxu0 %v737
    %836 = vmatpush.msra.mxu0 %v735
    %837 = vmatpush.msra.mxu0 %v733
    %838 = vmatpush.msra.mxu0 %v731
    %839 = vmatmul.f32.gmra.mxu0 %v632
    %v840 = vpop.f32.mrf.mxu0
    %v841 = vadd.f32 %v821, %v840
    %842 = vdwg.mxu0
    %843 = vmatpush.msra.mxu0 %v666
    %844 = vmatpush.msra.mxu0 %v664
    %845 = vmatpush.msra.mxu0 %v662
    %846 = vmatpush.msra.mxu0 %v660
    %847 = vmatpush.msra.mxu0 %v658
    %848 = vmatpush.msra.mxu0 %v656
    %849 = vmatpush.msra.mxu0 %v654
    %850 = vmatpush.msra.mxu0 %v652
    %851 = vmatpush.msra.mxu0 %v650
    %852 = vmatpush.msra.mxu0 %v648
    %853 = vmatpush.msra.mxu0 %v646
    %854 = vmatpush.msra.mxu0 %v644
    %855 = vmatpush.msra.mxu0 %v642
    %856 = vmatpush.msra.mxu0 %v640
    %857 = vmatpush.msra.mxu0 %v638
    %858 = vmatpush.msra.mxu0 %v636
    %859 = vmatmul.f32.gmra.mxu0 %v623
    %v860 = vpop.f32.mrf.mxu0
    %v861 = vadd.f32 0.0, %v860
    %862 = vdwg.mxu0
    %863 = vmatpush.msra.mxu0 %v698
    %864 = vmatpush.msra.mxu0 %v696
    %865 = vmatpush.msra.mxu0 %v694
    %866 = vmatpush.msra.mxu0 %v692
    %867 = vmatpush.msra.mxu0 %v690
    %868 = vmatpush.msra.mxu0 %v688
    %869 = vmatpush.msra.mxu0 %v686
    %870 = vmatpush.msra.mxu0 %v684
    %871 = vmatpush.msra.mxu0 %v682
    %872 = vmatpush.msra.mxu0 %v680
    %873 = vmatpush.msra.mxu0 %v678
    %874 = vmatpush.msra.mxu0 %v676
    %875 = vmatpush.msra.mxu0 %v674
    %876 = vmatpush.msra.mxu0 %v672
    %877 = vmatpush.msra.mxu0 %v670
    %878 = vmatpush.msra.mxu0 %v668
    %879 = vmatmul.f32.gmra.mxu0 %v624
    %v880 = vpop.f32.mrf.mxu0
    %v881 = vadd.f32 %v861, %v880
    %882 = vdwg.mxu0
    %883 = vmatpush.msra.mxu0 %v730
    %884 = vmatpush.msra.mxu0 %v728
    %885 = vmatpush.msra.mxu0 %v726
    %886 = vmatpush.msra.mxu0 %v724
    %887 = vmatpush.msra.mxu0 %v722
    %888 = vmatpush.msra.mxu0 %v720
    %889 = vmatpush.msra.mxu0 %v718
    %890 = vmatpush.msra.mxu0 %v716
    %891 = vmatpush.msra.mxu0 %v714
    %892 = vmatpush.msra.mxu0 %v712
    %893 = vmatpush.msra.mxu0 %v710
    %894 = vmatpush.msra.mxu0 %v708
    %895 = vmatpush.msra.mxu0 %v706
    %896 = vmatpush.msra.mxu0 %v704
    %897 = vmatpush.msra.mxu0 %v702
    %898 = vmatpush.msra.mxu0 %v700
    %899 = vmatmul.f32.gmra.mxu0 %v631
    %v900 = vpop.f32.mrf.mxu0
    %v901 = vadd.f32 %v881, %v900
    %902 = vdwg.mxu0
    %903 = vmatpush.msra.mxu0 %v762
    %904 = vmatpush.msra.mxu0 %v760
    %905 = vmatpush.msra.mxu0 %v758
    %906 = vmatpush.msra.mxu0 %v756
    %907 = vmatpush.msra.mxu0 %v754
    %908 = vmatpush.msra.mxu0 %v752
    %909 = vmatpush.msra.mxu0 %v750
    %910 = vmatpush.msra.mxu0 %v748
    %911 = vmatpush.msra.mxu0 %v746
    %912 = vmatpush.msra.mxu0 %v744
    %913 = vmatpush.msra.mxu0 %v742
    %914 = vmatpush.msra.mxu0 %v740
    %915 = vmatpush.msra.mxu0 %v738
    %916 = vmatpush.msra.mxu0 %v736
    %917 = vmatpush.msra.mxu0 %v734
    %918 = vmatpush.msra.mxu0 %v732
    %919 = vmatmul.f32.gmra.mxu0 %v632
    %v920 = vpop.f32.mrf.mxu0
    %v921 = vadd.f32 %v901, %v920
    %922 = vdwg.mxu0
    %v923 = vxor.u32 %v841, 2147483648
    %v924 = vxor.u32 %v921, 2147483648
    %v925 = vmul.f32 %v923, 1.442695
    %v926 = vpow.pop %v925
    %v927 = vmul.f32 %v924, 1.442695
    %v928 = vpow.pop %v927
    %v929 = vadd.f32 %v926, 1.0
    %v930 = vadd.f32 %v928, 1.0
    %v931 = vrcp.pop %v929
    %v932 = vmul.f32 %v929, %v931
    %v933 = vsub.f32 1.0, %v932
    %v934 = vmul.f32 %v931, %v933
    %v935 = vadd.f32 %v931, %v934
    %vm936 = vweird.f32 %v929
    %vm937 = vweird.f32 %v931
    %vm938 = vmor %vm936, %vm937
    %v939 = vsel %vm938, %v931, %v935
    %v940 = vand.u32 2147483647, %v929
    %vm941 = vcmp.eq.f32.partialorder %v940, 8.507059e+37
    %v942 = vand.u32 %v929, 2147483648
    %v943 = vor.u32 1.1754944e-38, %v942
    %v944 = vsel %vm941, %v943, %v939
    %v945 = vmul.f32 1.0, %v944
    %v946 = vrcp.pop %v930
    %v947 = vmul.f32 %v930, %v946
    %v948 = vsub.f32 1.0, %v947
    %v949 = vmul.f32 %v946, %v948
    %v950 = vadd.f32 %v946, %v949
    %vm951 = vweird.f32 %v930
    %vm952 = vweird.f32 %v946
    %vm953 = vmor %vm951, %vm952
    %v954 = vsel %vm953, %v946, %v950
    %v955 = vand.u32 2147483647, %v930
    %vm956 = vcmp.eq.f32.partialorder %v955, 8.507059e+37
    %v957 = vand.u32 %v930, 2147483648
    %v958 = vor.u32 1.1754944e-38, %v957
    %v959 = vsel %vm956, %v958, %v954
    %v960 = vmul.f32 1.0, %v959
    %v963 = vrot.slane %v960, 7
    %vm964 = vcmask 1040384
    %v965 = vsel %vm964, %v945, %v963
    %v966 = vsel %vm622, %v945, %v963
    %v967 = vrot.slane %v966, 1
    %v968 = vperm.slane %v965, 0
    %v969 = vperm.slane %v965, 1
    %v970 = vperm.slane %v967, 0
    %v971 = vperm.slane %v967, 1
    %v976 = vmul.f32 %v519, %v968
    %v977 = vmul.f32 %v520, %v969
    %v978 = vmul.f32 %v521, %v968
    %v979 = vmul.f32 %v522, %v969
    %v980 = vmul.f32 %v523, %v968
    %v981 = vmul.f32 %v524, %v969
    %v982 = vmul.f32 %v525, %v968
    %v983 = vmul.f32 %v526, %v969
    %v984 = vmul.f32 %v527, %v970
    %v985 = vmul.f32 %v528, %v971
    %v986 = vmul.f32 %v529, %v970
    %v987 = vmul.f32 %v530, %v971
    %v988 = vmul.f32 %v531, %v970
    %v989 = vmul.f32 %v532, %v971
    %v990 = vmul.f32 %v533, %v970
    %v991 = vmul.f32 %v534, %v971
    %992 = vst [vmem:[#allocation7] sm:$0xff] %v976
    %993 = vst [vmem:[#allocation7 + $0x8] sm:$0xff] %v977
    %994 = vst [vmem:[#allocation7 + $0x10] sm:$0xff] %v978
    %995 = vst [vmem:[#allocation7 + $0x18] sm:$0xff] %v979
    %996 = vst [vmem:[#allocation7 + $0x20] sm:$0xff] %v980
    %997 = vst [vmem:[#allocation7 + $0x28] sm:$0xff] %v981
    %998 = vst [vmem:[#allocation7 + $0x30] sm:$0xff] %v982
    %999 = vst [vmem:[#allocation7 + $0x38] sm:$0xff] %v983
    %1000 = vst [vmem:[#allocation7 + $0x40] sm:$0xff] %v984
    %1001 = vst [vmem:[#allocation7 + $0x48] sm:$0xff] %v985
    %1002 = vst [vmem:[#allocation7 + $0x50] sm:$0xff] %v986
    %1003 = vst [vmem:[#allocation7 + $0x58] sm:$0xff] %v987
    %1004 = vst [vmem:[#allocation7 + $0x60] sm:$0xff] %v988
    %1005 = vst [vmem:[#allocation7 + $0x68] sm:$0xff] %v989
    %1006 = vst [vmem:[#allocation7 + $0x70] sm:$0xff] %v990
    %1007 = vst [vmem:[#allocation7 + $0x78] sm:$0xff] %v991
    // Predicated region
    $region26: #{tpu_custom_call.1} parent=1 // pred_check
      _
    $region27: #{tpu_custom_call.1} parent=1 // pred_check_branch
      %1009 = sbr.rel (0) target = $region29
    $region28: #{tpu_custom_call.1} parent=1 // pred_region
      %1011 = vsyncadd [#allocation4], 0
      %s1012 = sshll.u32 [#allocation7], 4
      %s1013 = int_to_ptr.vmem [resolvable:$true] %s1012
      %s1014 = sshll.u32 %s4, 4
      %s1015 = int_to_ptr.hbm [resolvable:$true] %s1014
      %1020 = dma.vmem_to_hbm [thread:$0]  %s1013, 2048, %s1015, [#allocation4], 256, 256, 16
    $region29: #{tpu_custom_call.1} parent=1 // pred_fallthru
      _
    // Predicated region
    $region30: #{tpu_custom_call.1} parent=1 // pred_check
      _
    $region31: #{tpu_custom_call.1} parent=1 // pred_check_branch
      %1022 = sbr.rel (0) target = $region33
    $region32: #{tpu_custom_call.1} parent=1 // pred_region
      %1024 = dma.done [#allocation4], 2048
    $region33: #{tpu_custom_call.1} parent=1 // pred_fallthru
      _
    %1025 = vsyncpa [#allocation3], 1
    %1026 = vsyncpa [#allocation6], 1
    %1027 = vsyncpa [#allocation4], 1

</llo_original>
